<compile_context>
chip_gen: v5e
topology: v5e:2x2
jax: 0.10.0
libtpu: 0.0.40
codegen_flags: <defaults>
</compile_context>

<pallas_src>
import functools

import jax
import jax.numpy as jnp
import numpy as np
from jax.experimental import pallas as pl
from jax.experimental.pallas import tpu as pltpu


def _spatial_attention_kernel(x_ref, t_ref, o_ref, *, n_channels, c_chunk):
    """x_ref: (Bt, C, HW) native dtype; t_ref: (2, HW, HW) f32; o_ref: (Bt, HW)."""
    inv_c = 1.0 / n_channels

    # Channel reduction: running sum / running max over C in chunks (keeps only
    # two (Bt, HW) lane-dense f32 accumulators live regardless of C).
    x0 = x_ref[:, 0:c_chunk, :].astype(jnp.float32)          # (Bt, cc, HW)
    csum = jnp.sum(x0, axis=1)                               # (Bt, HW)
    cmax = jnp.max(x0, axis=1)                               # (Bt, HW)
    for lo in range(c_chunk, n_channels, c_chunk):           # static; empty if C<=cc
        hi = min(lo + c_chunk, n_channels)
        xc = x_ref[:, lo:hi, :].astype(jnp.float32)
        csum = csum + jnp.sum(xc, axis=1)
        cmax = jnp.maximum(cmax, jnp.max(xc, axis=1))
    avg = csum * inv_c                                       # mean = sum * (1/C)

    # 7x7 "same" conv of the 2-channel map as two MXU matmuls against the
    # precomputed block-Toeplitz operator, then sigmoid.  Lane-dense store.
    y = jnp.dot(avg, t_ref[0], preferred_element_type=jnp.float32)
    y = y + jnp.dot(cmax, t_ref[1], preferred_element_type=jnp.float32)
    o_ref[...] = jax.nn.sigmoid(y).astype(o_ref.dtype)


def _conv_as_block_toeplitz(weight, H, W, pad):
    """Repack a (1,2,k,k) OIHW conv weight into a dense (2, H*W, H*W) operator
    implementing a zero-padded 'same' cross-correlation over the flattened
    spatial index (rows: input position, cols: output position)."""
    k = weight.shape[-1]
    w = weight.reshape(2, k, k).astype(jnp.float32)
    dy = (jnp.arange(H)[:, None, None, None]
          - jnp.arange(H)[None, None, :, None] + pad)        # (H,1,H,1): h_in - h_out + pad
    dx = (jnp.arange(W)[None, :, None, None]
          - jnp.arange(W)[None, None, None, :] + pad)        # (1,W,1,W): w_in - w_out + pad
    valid = (dy >= 0) & (dy < k) & (dx >= 0) & (dx < k)      # (H,W,H,W)
    taps = w[:, jnp.clip(dy, 0, k - 1), jnp.clip(dx, 0, k - 1)]   # (2,H,W,H,W)
    t = jnp.where(valid[None], taps, 0.0)
    return t.reshape(2, H * W, H * W)


def _pick_batch_tile(B, C, HW, itemsize, budget_bytes=6 * 1024 * 1024):
    """Largest batch tile whose x-block fits `budget_bytes`; prefer divisors of
    B (no ragged tail) that keep the (bt, HW) output block sublane-aligned."""
    per_image = max(C * HW * itemsize, 1)
    bt = int(max(1, min(B, budget_bytes // per_image)))
    candidates = [b for b in range(bt, 0, -1)
                  if B % b == 0 and (b == B or b % 8 == 0)]
    if not candidates:
        candidates = [b for b in range(bt, 0, -1) if B % b == 0]
    return candidates[0]


def spatial_attention(x, weight, *, kernel_size=7):
    """x: (B, C, H, W) float.  weight: (1, 2, k, k).  Returns (B, 1, H, W)."""
    assert kernel_size in (3, 7), "kernel size must be 3 or 7"
    pad = 3 if kernel_size == 7 else 1
    B, C, H, W = x.shape
    HW = H * W

    # Dense Toeplitz operator is O((H*W)^2) — fine for CBAM-sized maps.
    # TODO(synk): for very large H*W, switch to a separable horizontal-Toeplitz
    # matmul + k vertically shifted accumulates instead of the dense operator.
    t_bytes = 2 * HW * HW * 4
    assert t_bytes <= 8 * 1024 * 1024, "spatial map too large for dense-Toeplitz path"

    t = _conv_as_block_toeplitz(weight, H, W, pad)           # (2, HW, HW) f32
    x_flat = x.reshape(B, C, HW)                             # native dtype, lane-dense

    itemsize = jnp.dtype(x.dtype).itemsize
    bt = _pick_batch_tile(B, C, HW, itemsize)
    out_dtype = x.dtype

    # Channel chunk aligned to the dtype's sublane packing (f32: 8, bf16: 16,
    # int8/fp8: 32) so sub-32-bit slices never straddle packed sublanes.
    c_chunk = min(C, 8 * max(1, 4 // itemsize))

    # Scoped-VMEM request: double-buffered x/out blocks + resident operator +
    # headroom, clamped to >=32 MiB (raises v5e's 16 MiB default; safe on
    # v6e/v7x since actual usage stays well below the physical limit).
    x_block = bt * C * HW * itemsize
    o_block = bt * HW * jnp.dtype(out_dtype).itemsize
    vmem_limit = int(max(2 * (x_block + o_block) + t_bytes + (4 << 20),
                         32 * 1024 * 1024))

    # Advisory cost for XLA's scheduler: memory-bound on x, small MXU tail.
    cost = pl.CostEstimate(
        flops=int(B * (2 * C * HW + 2 * 2 * HW * HW)),
        transcendentals=int(B * HW),
        bytes_accessed=int(B * C * HW * itemsize + t_bytes + B * HW * itemsize))

    kernel = functools.partial(_spatial_attention_kernel,
                               n_channels=C, c_chunk=c_chunk)

    out_flat = pl.pallas_call(
        kernel,
        out_shape=jax.ShapeDtypeStruct((B, HW), out_dtype),
        grid=(B // bt,),
        in_specs=[
            pl.BlockSpec((bt, C, HW), lambda b: (b, 0, 0)),   # x tile, native dtype
            pl.BlockSpec((2, HW, HW), lambda b: (0, 0, 0)),   # Toeplitz operator (resident)
        ],
        out_specs=pl.BlockSpec((bt, HW), lambda b: (b, 0)),
        compiler_params=pltpu.CompilerParams(
            dimension_semantics=("parallel",),                # batch independent -> 2 TCs on v7x
            vmem_limit_bytes=vmem_limit),
        cost_estimate=cost,
    )(x_flat, t)

    return out_flat.reshape(B, 1, H, W)


def _reference(x, weight, *, kernel_size=7):
    """Pure-JAX/XLA reference matching the torch module (NCHW, OIHW weight)."""
    pad = 3 if kernel_size == 7 else 1
    avg = jnp.mean(x, axis=1, keepdims=True)
    mx = jnp.max(x, axis=1, keepdims=True)
    feat = jnp.concatenate([avg, mx], axis=1)
    y = jax.lax.conv_general_dilated(
        feat, weight, window_strides=(1, 1),
        padding=((pad, pad), (pad, pad)),
        dimension_numbers=("NCHW", "OIHW", "NCHW"),
        precision=jax.lax.Precision.HIGHEST)
    return jax.nn.sigmoid(y)


if __name__ == "__main__":
    key = jax.random.PRNGKey(0)
    kx, kw = jax.random.split(key)

    B, C, H, W = 2, 4, 16, 16
    kernel_size = 7

    x = jax.random.normal(kx, (B, C, H, W), dtype=jnp.float32)

    # Deterministic Conv2d(2, 1, 7, bias=False)-style init (kaiming-uniform).
    fan_in = 2 * kernel_size * kernel_size
    bound = 1.0 / np.sqrt(fan_in)
    weight = jax.random.uniform(
        kw, (1, 2, kernel_size, kernel_size),
        minval=-bound, maxval=bound, dtype=jnp.float32)

    out = spatial_attention(x, weight, kernel_size=kernel_size)
    out = jax.block_until_ready(out)

    ref = _reference(x, weight, kernel_size=kernel_size)
    # Tolerance budget covers possible reduced-precision MXU passes for the
    # f32 Toeplitz matmul; typical agreement is ~1e-6.
    np.testing.assert_allclose(np.asarray(out), np.asarray(ref),
                               rtol=1e-3, atol=1e-3)

    print("KERNEL_OK")
</pallas_src>

<mosaic_0001>
module attributes {stable_mosaic.version = 11 : i64} {
  func.func @_spatial_attention_kernel(%arg0: i32, %arg1: memref<2x4x256xf32, #tpu.memory_space<vmem>>, %arg2: memref<2x256x256xf32, #tpu.memory_space<vmem>>, %arg3: memref<2x256xf32, #tpu.memory_space<vmem>>) attributes {dimension_semantics = [#tpu.dimension_semantics<parallel>], iteration_bounds = array<i64: 1>, scalar_prefetch = 0 : i64, scratch_operands = 0 : i64, tpu.core_type = #tpu.core_type<tc>, window_params = [{transform_indices = @transform_0, window_bounds = array<i64: 2, 4, 256>}, {pipeline_mode = #tpu.pipeline_mode<synchronous>, transform_indices = @transform_1, window_bounds = array<i64: 2, 256, 256>}, {transform_indices = @transform_2, window_bounds = array<i64: 2, 256>}]} {
    %c0 = arith.constant 0 : index
    %c0_0 = arith.constant 0 : index
    %c0_1 = arith.constant 0 : index
    %0 = vector.load %arg1[%c0, %c0_0, %c0_1] : memref<2x4x256xf32, #tpu.memory_space<vmem>>, vector<2x4x256xf32>
    %cst = arith.constant dense<0.000000e+00> : vector<2x256xf32>
    %1 = vector.multi_reduction <add>, %0, %cst [1] : vector<2x4x256xf32> to vector<2x256xf32>
    %cst_2 = arith.constant dense<0xFF800000> : vector<2x256xf32>
    %2 = vector.multi_reduction <maximumf>, %0, %cst_2 [1] : vector<2x4x256xf32> to vector<2x256xf32>
    %cst_3 = arith.constant 2.500000e-01 : f32
    %3 = vector.broadcast %cst_3 : f32 to vector<2x256xf32>
    %4 = arith.mulf %1, %3 : vector<2x256xf32>
    %c0_4 = arith.constant 0 : index
    %c0_5 = arith.constant 0 : index
    %c0_6 = arith.constant 0 : index
    %5 = vector.load %arg2[%c0_4, %c0_5, %c0_6] : memref<2x256x256xf32, #tpu.memory_space<vmem>>, vector<1x256x256xf32>
    %6 = vector.shape_cast %5 : vector<1x256x256xf32> to vector<256x256xf32>
    %cst_7 = arith.constant dense<0.000000e+00> : vector<2x256xf32>
    %7 = tpu.matmul %4, %6, %cst_7 {dimension_numbers = #tpu.dot_dimension_numbers<[1], [0], [0], [1], [0, 0, 1, 1], [], []>} : vector<2x256xf32>, vector<256x256xf32>, vector<2x256xf32> -> vector<2x256xf32>
    %c1 = arith.constant 1 : index
    %c0_8 = arith.constant 0 : index
    %c0_9 = arith.constant 0 : index
    %8 = vector.load %arg2[%c1, %c0_8, %c0_9] : memref<2x256x256xf32, #tpu.memory_space<vmem>>, vector<1x256x256xf32>
    %9 = vector.shape_cast %8 : vector<1x256x256xf32> to vector<256x256xf32>
    %cst_10 = arith.constant dense<0.000000e+00> : vector<2x256xf32>
    %10 = tpu.matmul %2, %9, %cst_10 {dimension_numbers = #tpu.dot_dimension_numbers<[1], [0], [0], [1], [0, 0, 1, 1], [], []>} : vector<2x256xf32>, vector<256x256xf32>, vector<2x256xf32> -> vector<2x256xf32>
    %11 = arith.addf %7, %10 : vector<2x256xf32>
    %12 = arith.negf %11 : vector<2x256xf32>
    %13 = math.exp %12 : vector<2x256xf32>
    %cst_11 = arith.constant 1.000000e+00 : f32
    %14 = vector.broadcast %cst_11 : f32 to vector<2x256xf32>
    %15 = arith.addf %14, %13 : vector<2x256xf32>
    %16 = arith.divf %14, %15 : vector<2x256xf32>
    %c0_12 = arith.constant 0 : index
    %c0_13 = arith.constant 0 : index
    %17 = vector.load %arg3[%c0_12, %c0_13] : memref<2x256xf32, #tpu.memory_space<vmem>>, vector<2x256xf32>
    tpu.vector_store %arg3[%c0_12, %c0_13], %16 {strides = array<i32>} : memref<2x256xf32, #tpu.memory_space<vmem>>, vector<2x256xf32>,
    return
  }
  func.func @transform_0(%arg0: i32) -> (i32, i32, i32) {
    %c0_i32 = arith.constant 0 : i32
    %c0_i32_0 = arith.constant 0 : i32
    %c0_i32_1 = arith.constant 0 : i32
    return %arg0, %c0_i32, %c0_i32_0 : i32, i32, i32
  }
  func.func @transform_1(%arg0: i32) -> (i32, i32, i32) {
    %c0_i32 = arith.constant 0 : i32
    %c0_i32_0 = arith.constant 0 : i32
    %c0_i32_1 = arith.constant 0 : i32
    %c0_i32_2 = arith.constant 0 : i32
    return %c0_i32, %c0_i32_0, %c0_i32_1 : i32, i32, i32
  }
  func.func @transform_2(%arg0: i32) -> (i32, i32) {
    %c0_i32 = arith.constant 0 : i32
    %c0_i32_0 = arith.constant 0 : i32
    return %arg0, %c0_i32 : i32, i32
  }
}

</mosaic_0001>

<llo_original>
// kernel: tpu_custom_call.1
$region0: #{tpu_custom_call.1}
  #allocation0 [shape = 'u32[]', space=smem, size = 0x4, offset = 0x4, fixed_abs, tag = 'smem constant byte address 0x4 - core index']
  #allocation1 [shape = 'u32[72,128]{1,0:T(1,128)}', space=vmem, size = 0x9000, scoped, tag = 'internal scratch']
  %s0 = inlined_call_operand.hbm [shape: f32[2,4,256], index: 0, kind: input, shape index: {}]
  %s1 = inlined_call_operand.hbm [shape: f32[2,256,256], index: 1, kind: input, shape index: {}]
  %s2 = inlined_call_operand.hbm [shape: f32[2,256], index: 2, kind: output, shape index: {}]
  %s3 = sld [smem:[#allocation0]]
  $region26: #{tpu_custom_call.1} parent=0
    _
  %s5 = ssub.s32 1, %s3
  %s6 = scalar_select 0, %s5, %s3
  $region1: #{tpu_custom_call.1} parent=0
    #allocation2 [shape = 'u8[8192]{0}', space=vmem, size = 0x2000, scoped, tag = 'input window, operand 0, single buffered']
    #allocation3 [shape = 's32[1]{0}', space=sflag, size = 0x4, scoped, tag = 'scoped memory for tpu_custom_call.1']
    #allocation4 [shape = 's32[1]{0}', space=sflag, size = 0x4, scoped, tag = 'scoped memory for tpu_custom_call.1']
    #allocation5 [shape = 'u8[524288]{0}', space=vmem, size = 0x80000, scoped, tag = 'input window, operand 1, single buffered']
    #allocation6 [shape = 's32[1]{0}', space=sflag, size = 0x4, scoped, tag = 'scoped memory for tpu_custom_call.1']
    #allocation7 [shape = 'u8[2048]{0}', space=vmem, size = 0x800, scoped, tag = 'output window, operand 0, single buffered']
    %7 = vsyncpa [#allocation3], 0
    %8 = vsyncpa [#allocation6], 0
    %9 = vsyncpa [#allocation4], 0
    // Predicated region
    $region2: #{tpu_custom_call.1} parent=1 // pred_check
      _
    $region3: #{tpu_custom_call.1} parent=1 // pred_check_branch
      %11 = sbr.rel (0) target = $region5
    $region4: #{tpu_custom_call.1} parent=1 // pred_region
      %13 = vsyncadd [#allocation3], 0
      %s14 = sshll.u32 %s0, 4
      %s15 = int_to_ptr.hbm [resolvable:$true] %s14
      %s16 = sshll.u32 [#allocation2], 4
      %s17 = int_to_ptr.vmem [resolvable:$true] %s16
      %22 = dma.hbm_to_vmem [thread:$0]  %s15, 256, %s17, [#allocation3], 128, 128, 8
    $region5: #{tpu_custom_call.1} parent=1 // pred_fallthru
      _
    // Predicated region
    $region6: #{tpu_custom_call.1} parent=1 // pred_check
      _
    $region7: #{tpu_custom_call.1} parent=1 // pred_check_branch
      %24 = sbr.rel (0) target = $region9
    $region8: #{tpu_custom_call.1} parent=1 // pred_region
      %26 = vsyncadd [#allocation6], 0
      %s27 = sshll.u32 %s1, 4
      %s28 = int_to_ptr.hbm [resolvable:$true] %s27
      %s29 = sshll.u32 [#allocation5], 4
      %s30 = int_to_ptr.vmem [resolvable:$true] %s29
      %35 = dma.hbm_to_vmem [thread:$0]  %s28, 16384, %s30, [#allocation6], 256, 256, 16
    $region9: #{tpu_custom_call.1} parent=1 // pred_fallthru
      _
    // Predicated region
    $region10: #{tpu_custom_call.1} parent=1 // pred_check
      _
    $region11: #{tpu_custom_call.1} parent=1 // pred_check_branch
      %37 = sbr.rel (0) target = $region13
    $region12: #{tpu_custom_call.1} parent=1 // pred_region
      %39 = dma.done [#allocation3], 256
    $region13: #{tpu_custom_call.1} parent=1 // pred_fallthru
      _
    // Predicated region
    $region14: #{tpu_custom_call.1} parent=1 // pred_check
      _
    $region15: #{tpu_custom_call.1} parent=1 // pred_check_branch
      %41 = sbr.rel (0) target = $region17
    $region16: #{tpu_custom_call.1} parent=1 // pred_region
      %43 = dma.done [#allocation6], 16384
    $region17: #{tpu_custom_call.1} parent=1 // pred_fallthru
      _
    %v44 = vld [vmem:[#allocation2] sm:$0xff]
    %v45 = vld [vmem:[#allocation2 + $0x8] sm:$0xff]
    %48 = vst [vmem:[#allocation1] ss:$2 sm:$0xff] %v44
    %v49 = vld.sshfl [vmem:[#allocation1] sm:$0xff pattern:$0x75316420]
    %v50 = vld.sshfl [vmem:[#allocation1 + $0x8] sm:$0xff pattern:$0x75316420]
    %s51 = scalar_lea.vmem [#allocation1], 16
    %52 = vst [vmem:[%s51] ss:$2 sm:$0xff] %v45
    %v53 = vld.sshfl [vmem:[#allocation1 + $0x10] sm:$0xff pattern:$0x75316420]
    %v54 = vld.sshfl [vmem:[#allocation1 + $0x18] sm:$0xff pattern:$0x75316420]
    %vm59 = vcmask 1043456
    %v60 = vsel %vm59, %v49, 0.0
    %v61 = vrot.slane %v60, 4
    %v62 = vadd.f32 %v60, %v61
    %v63 = vrot.slane %v62, 2
    %v64 = vadd.f32 %v62, %v63
    %v65 = vrot.slane %v64, 1
    %v66 = vadd.f32 %v64, %v65
    %v67 = vsel %vm59, %v50, 0.0
    %v68 = vrot.slane %v67, 4
    %v69 = vadd.f32 %v67, %v68
    %v70 = vrot.slane %v69, 2
    %v71 = vadd.f32 %v69, %v70
    %v72 = vrot.slane %v71, 1
    %v73 = vadd.f32 %v71, %v72
    %v74 = vsel %vm59, %v53, 0.0
    %v75 = vrot.slane %v74, 4
    %v76 = vadd.f32 %v74, %v75
    %v77 = vrot.slane %v76, 2
    %v78 = vadd.f32 %v76, %v77
    %v79 = vrot.slane %v78, 1
    %v80 = vadd.f32 %v78, %v79
    %v81 = vsel %vm59, %v54, 0.0
    %v82 = vrot.slane %v81, 4
    %v83 = vadd.f32 %v81, %v82
    %v84 = vrot.slane %v83, 2
    %v85 = vadd.f32 %v83, %v84
    %v86 = vrot.slane %v85, 1
    %v87 = vadd.f32 %v85, %v86
    %88 = vst [vmem:[#allocation1] ss:$2 sm:$0xff] %v44
    %v89 = vld.sshfl [vmem:[#allocation1] sm:$0xff pattern:$0x75316420]
    %v90 = vld.sshfl [vmem:[#allocation1 + $0x8] sm:$0xff pattern:$0x75316420]
    %s91 = scalar_lea.vmem [#allocation1], 16
    %92 = vst [vmem:[%s91] ss:$2 sm:$0xff] %v45
    %v93 = vld.sshfl [vmem:[#allocation1 + $0x10] sm:$0xff pattern:$0x75316420]
    %v94 = vld.sshfl [vmem:[#allocation1 + $0x18] sm:$0xff pattern:$0x75316420]
    %v99 = vsel %vm59, %v89, -inf
    %v100 = vrot.slane %v99, 4
    %v101 = vmax.f32 %v99, %v100
    %v102 = vrot.slane %v101, 2
    %v103 = vmax.f32 %v101, %v102
    %v104 = vrot.slane %v103, 1
    %v105 = vmax.f32 %v103, %v104
    %v106 = vsel %vm59, %v90, -inf
    %v107 = vrot.slane %v106, 4
    %v108 = vmax.f32 %v106, %v107
    %v109 = vrot.slane %v108, 2
    %v110 = vmax.f32 %v108, %v109
    %v111 = vrot.slane %v110, 1
    %v112 = vmax.f32 %v110, %v111
    %v113 = vsel %vm59, %v93, -inf
    %v114 = vrot.slane %v113, 4
    %v115 = vmax.f32 %v113, %v114
    %v116 = vrot.slane %v115, 2
    %v117 = vmax.f32 %v115, %v116
    %v118 = vrot.slane %v117, 1
    %v119 = vmax.f32 %v117, %v118
    %v120 = vsel %vm59, %v94, -inf
    %v121 = vrot.slane %v120, 4
    %v122 = vmax.f32 %v120, %v121
    %v123 = vrot.slane %v122, 2
    %v124 = vmax.f32 %v122, %v123
    %v125 = vrot.slane %v124, 1
    %v126 = vmax.f32 %v124, %v125
    %v127 = vmul.f32 %v66, 0.25
    %v128 = vmul.f32 %v73, 0.25
    %v129 = vmul.f32 %v80, 0.25
    %v130 = vmul.f32 %v87, 0.25
    %v131 = vld [vmem:[#allocation5] sm:$0xff]
    %v132 = vld [vmem:[#allocation5 + $0x8] sm:$0xff]
    %v133 = vld [vmem:[#allocation5 + $0x10] sm:$0xff]
    %v134 = vld [vmem:[#allocation5 + $0x18] sm:$0xff]
    %v135 = vld [vmem:[#allocation5 + $0x20] sm:$0xff]
    %v136 = vld [vmem:[#allocation5 + $0x28] sm:$0xff]
    %v137 = vld [vmem:[#allocation5 + $0x30] sm:$0xff]
    %v138 = vld [vmem:[#allocation5 + $0x38] sm:$0xff]
    %v139 = vld [vmem:[#allocation5 + $0x40] sm:$0xff]
    %v140 = vld [vmem:[#allocation5 + $0x48] sm:$0xff]
    %v141 = vld [vmem:[#allocation5 + $0x50] sm:$0xff]
    %v142 = vld [vmem:[#allocation5 + $0x58] sm:$0xff]
    %v143 = vld [vmem:[#allocation5 + $0x60] sm:$0xff]
    %v144 = vld [vmem:[#allocation5 + $0x68] sm:$0xff]
    %v145 = vld [vmem:[#allocation5 + $0x70] sm:$0xff]
    %v146 = vld [vmem:[#allocation5 + $0x78] sm:$0xff]
    %v147 = vld [vmem:[#allocation5 + $0x80] sm:$0xff]
    %v148 = vld [vmem:[#allocation5 + $0x88] sm:$0xff]
    %v149 = vld [vmem:[#allocation5 + $0x90] sm:$0xff]
    %v150 = vld [vmem:[#allocation5 + $0x98] sm:$0xff]
    %v151 = vld [vmem:[#allocation5 + $0xa0] sm:$0xff]
    %v152 = vld [vmem:[#allocation5 + $0xa8] sm:$0xff]
    %v153 = vld [vmem:[#allocation5 + $0xb0] sm:$0xff]
    %v154 = vld [vmem:[#allocation5 + $0xb8] sm:$0xff]
    %v155 = vld [vmem:[#allocation5 + $0xc0] sm:$0xff]
    %v156 = vld [vmem:[#allocation5 + $0xc8] sm:$0xff]
    %v157 = vld [vmem:[#allocation5 + $0xd0] sm:$0xff]
    %v158 = vld [vmem:[#allocation5 + $0xd8] sm:$0xff]
    %v159 = vld [vmem:[#allocation5 + $0xe0] sm:$0xff]
    %v160 = vld [vmem:[#allocation5 + $0xe8] sm:$0xff]
    %v161 = vld [vmem:[#allocation5 + $0xf0] sm:$0xff]
    %v162 = vld [vmem:[#allocation5 + $0xf8] sm:$0xff]
    %v163 = vld [vmem:[#allocation5 + $0x100] sm:$0xff]
    %v164 = vld [vmem:[#allocation5 + $0x108] sm:$0xff]
    %v165 = vld [vmem:[#allocation5 + $0x110] sm:$0xff]
    %v166 = vld [vmem:[#allocation5 + $0x118] sm:$0xff]
    %v167 = vld [vmem:[#allocation5 + $0x120] sm:$0xff]
    %v168 = vld [vmem:[#allocation5 + $0x128] sm:$0xff]
    %v169 = vld [vmem:[#allocation5 + $0x130] sm:$0xff]
    %v170 = vld [vmem:[#allocation5 + $0x138] sm:$0xff]
    %v171 = vld [vmem:[#allocation5 + $0x140] sm:$0xff]
    %v172 = vld [vmem:[#allocation5 + $0x148] sm:$0xff]
    %v173 = vld [vmem:[#allocation5 + $0x150] sm:$0xff]
    %v174 = vld [vmem:[#allocation5 + $0x158] sm:$0xff]
    %v175 = vld [vmem:[#allocation5 + $0x160] sm:$0xff]
    %v176 = vld [vmem:[#allocation5 + $0x168] sm:$0xff]
    %v177 = vld [vmem:[#allocation5 + $0x170] sm:$0xff]
    %v178 = vld [vmem:[#allocation5 + $0x178] sm:$0xff]
    %v179 = vld [vmem:[#allocation5 + $0x180] sm:$0xff]
    %v180 = vld [vmem:[#allocation5 + $0x188] sm:$0xff]
    %v181 = vld [vmem:[#allocation5 + $0x190] sm:$0xff]
    %v182 = vld [vmem:[#allocation5 + $0x198] sm:$0xff]
    %v183 = vld [vmem:[#allocation5 + $0x1a0] sm:$0xff]
    %v184 = vld [vmem:[#allocation5 + $0x1a8] sm:$0xff]
    %v185 = vld [vmem:[#allocation5 + $0x1b0] sm:$0xff]
    %v186 = vld [vmem:[#allocation5 + $0x1b8] sm:$0xff]
    %v187 = vld [vmem:[#allocation5 + $0x1c0] sm:$0xff]
    %v188 = vld [vmem:[#allocation5 + $0x1c8] sm:$0xff]
    %v189 = vld [vmem:[#allocation5 + $0x1d0] sm:$0xff]
    %v190 = vld [vmem:[#allocation5 + $0x1d8] sm:$0xff]
    %v191 = vld [vmem:[#allocation5 + $0x1e0] sm:$0xff]
    %v192 = vld [vmem:[#allocation5 + $0x1e8] sm:$0xff]
    %v193 = vld [vmem:[#allocation5 + $0x1f0] sm:$0xff]
    %v194 = vld [vmem:[#allocation5 + $0x1f8] sm:$0xff]
    %s195 = scalar_lea.vmem [#allocation5], 512
    %v196 = vld [vmem:[%s195] sm:$0xff]
    %v197 = vld [vmem:[%s195 + $0x8] sm:$0xff]
    %v198 = vld [vmem:[%s195 + $0x10] sm:$0xff]
    %v199 = vld [vmem:[%s195 + $0x18] sm:$0xff]
    %v200 = vld [vmem:[%s195 + $0x20] sm:$0xff]
    %v201 = vld [vmem:[%s195 + $0x28] sm:$0xff]
    %v202 = vld [vmem:[%s195 + $0x30] sm:$0xff]
    %v203 = vld [vmem:[%s195 + $0x38] sm:$0xff]
    %v204 = vld [vmem:[%s195 + $0x40] sm:$0xff]
    %v205 = vld [vmem:[%s195 + $0x48] sm:$0xff]
    %v206 = vld [vmem:[%s195 + $0x50] sm:$0xff]
    %v207 = vld [vmem:[%s195 + $0x58] sm:$0xff]
    %v208 = vld [vmem:[%s195 + $0x60] sm:$0xff]
    %v209 = vld [vmem:[%s195 + $0x68] sm:$0xff]
    %v210 = vld [vmem:[%s195 + $0x70] sm:$0xff]
    %v211 = vld [vmem:[%s195 + $0x78] sm:$0xff]
    %v212 = vld [vmem:[%s195 + $0x80] sm:$0xff]
    %v213 = vld [vmem:[%s195 + $0x88] sm:$0xff]
    %v214 = vld [vmem:[%s195 + $0x90] sm:$0xff]
    %v215 = vld [vmem:[%s195 + $0x98] sm:$0xff]
    %v216 = vld [vmem:[%s195 + $0xa0] sm:$0xff]
    %v217 = vld [vmem:[%s195 + $0xa8] sm:$0xff]
    %v218 = vld [vmem:[%s195 + $0xb0] sm:$0xff]
    %v219 = vld [vmem:[%s195 + $0xb8] sm:$0xff]
    %v220 = vld [vmem:[%s195 + $0xc0] sm:$0xff]
    %v221 = vld [vmem:[%s195 + $0xc8] sm:$0xff]
    %v222 = vld [vmem:[%s195 + $0xd0] sm:$0xff]
    %v223 = vld [vmem:[%s195 + $0xd8] sm:$0xff]
    %v224 = vld [vmem:[%s195 + $0xe0] sm:$0xff]
    %v225 = vld [vmem:[%s195 + $0xe8] sm:$0xff]
    %v226 = vld [vmem:[%s195 + $0xf0] sm:$0xff]
    %v227 = vld [vmem:[%s195 + $0xf8] sm:$0xff]
    %v228 = vld [vmem:[%s195 + $0x100] sm:$0xff]
    %v229 = vld [vmem:[%s195 + $0x108] sm:$0xff]
    %v230 = vld [vmem:[%s195 + $0x110] sm:$0xff]
    %v231 = vld [vmem:[%s195 + $0x118] sm:$0xff]
    %v232 = vld [vmem:[%s195 + $0x120] sm:$0xff]
    %v233 = vld [vmem:[%s195 + $0x128] sm:$0xff]
    %v234 = vld [vmem:[%s195 + $0x130] sm:$0xff]
    %v235 = vld [vmem:[%s195 + $0x138] sm:$0xff]
    %v236 = vld [vmem:[%s195 + $0x140] sm:$0xff]
    %v237 = vld [vmem:[%s195 + $0x148] sm:$0xff]
    %v238 = vld [vmem:[%s195 + $0x150] sm:$0xff]
    %v239 = vld [vmem:[%s195 + $0x158] sm:$0xff]
    %v240 = vld [vmem:[%s195 + $0x160] sm:$0xff]
    %v241 = vld [vmem:[%s195 + $0x168] sm:$0xff]
    %v242 = vld [vmem:[%s195 + $0x170] sm:$0xff]
    %v243 = vld [vmem:[%s195 + $0x178] sm:$0xff]
    %v244 = vld [vmem:[%s195 + $0x180] sm:$0xff]
    %v245 = vld [vmem:[%s195 + $0x188] sm:$0xff]
    %v246 = vld [vmem:[%s195 + $0x190] sm:$0xff]
    %v247 = vld [vmem:[%s195 + $0x198] sm:$0xff]
    %v248 = vld [vmem:[%s195 + $0x1a0] sm:$0xff]
    %v249 = vld [vmem:[%s195 + $0x1a8] sm:$0xff]
    %v250 = vld [vmem:[%s195 + $0x1b0] sm:$0xff]
    %v251 = vld [vmem:[%s195 + $0x1b8] sm:$0xff]
    %v252 = vld [vmem:[%s195 + $0x1c0] sm:$0xff]
    %v253 = vld [vmem:[%s195 + $0x1c8] sm:$0xff]
    %v254 = vld [vmem:[%s195 + $0x1d0] sm:$0xff]
    %v255 = vld [vmem:[%s195 + $0x1d8] sm:$0xff]
    %v256 = vld [vmem:[%s195 + $0x1e0] sm:$0xff]
    %v257 = vld [vmem:[%s195 + $0x1e8] sm:$0xff]
    %v258 = vld [vmem:[%s195 + $0x1f0] sm:$0xff]
    %v259 = vld [vmem:[%s195 + $0x1f8] sm:$0xff]
    %vm264 = vcmask 1041409
    %v265 = vsel %vm264, %v119, %v105
    %v266 = vsel %vm264, %v126, %v112
    %269 = vmatpush.msra.mxu0 %v226
    %270 = vmatpush.msra.mxu0 %v224
    %271 = vmatpush.msra.mxu0 %v222
    %272 = vmatpush.msra.mxu0 %v220
    %273 = vmatpush.msra.mxu0 %v218
    %274 = vmatpush.msra.mxu0 %v216
    %275 = vmatpush.msra.mxu0 %v214
    %276 = vmatpush.msra.mxu0 %v212
    %277 = vmatpush.msra.mxu0 %v210
    %278 = vmatpush.msra.mxu0 %v208
    %279 = vmatpush.msra.mxu0 %v206
    %280 = vmatpush.msra.mxu0 %v204
    %281 = vmatpush.msra.mxu0 %v202
    %282 = vmatpush.msra.mxu0 %v200
    %283 = vmatpush.msra.mxu0 %v198
    %284 = vmatpush.msra.mxu0 %v196
    %285 = vmatmul.f32.gmra.mxu0 %v265
    %v286 = vpop.f32.mrf.mxu0
    %v287 = vadd.f32 0.0, %v286
    %288 = vdwg.mxu0
    %289 = vmatpush.msra.mxu0 %v258
    %290 = vmatpush.msra.mxu0 %v256
    %291 = vmatpush.msra.mxu0 %v254
    %292 = vmatpush.msra.mxu0 %v252
    %293 = vmatpush.msra.mxu0 %v250
    %294 = vmatpush.msra.mxu0 %v248
    %295 = vmatpush.msra.mxu0 %v246
    %296 = vmatpush.msra.mxu0 %v244
    %297 = vmatpush.msra.mxu0 %v242
    %298 = vmatpush.msra.mxu0 %v240
    %299 = vmatpush.msra.mxu0 %v238
    %300 = vmatpush.msra.mxu0 %v236
    %301 = vmatpush.msra.mxu0 %v234
    %302 = vmatpush.msra.mxu0 %v232
    %303 = vmatpush.msra.mxu0 %v230
    %304 = vmatpush.msra.mxu0 %v228
    %305 = vmatmul.f32.gmra.mxu0 %v266
    %v306 = vpop.f32.mrf.mxu0
    %v307 = vadd.f32 %v287, %v306
    %308 = vdwg.mxu0
    %309 = vmatpush.msra.mxu0 %v227
    %310 = vmatpush.msra.mxu0 %v225
    %311 = vmatpush.msra.mxu0 %v223
    %312 = vmatpush.msra.mxu0 %v221
    %313 = vmatpush.msra.mxu0 %v219
    %314 = vmatpush.msra.mxu0 %v217
    %315 = vmatpush.msra.mxu0 %v215
    %316 = vmatpush.msra.mxu0 %v213
    %317 = vmatpush.msra.mxu0 %v211
    %318 = vmatpush.msra.mxu0 %v209
    %319 = vmatpush.msra.mxu0 %v207
    %320 = vmatpush.msra.mxu0 %v205
    %321 = vmatpush.msra.mxu0 %v203
    %322 = vmatpush.msra.mxu0 %v201
    %323 = vmatpush.msra.mxu0 %v199
    %324 = vmatpush.msra.mxu0 %v197
    %325 = vmatmul.f32.gmra.mxu0 %v265
    %v326 = vpop.f32.mrf.mxu0
    %v327 = vadd.f32 0.0, %v326
    %328 = vdwg.mxu0
    %329 = vmatpush.msra.mxu0 %v259
    %330 = vmatpush.msra.mxu0 %v257
    %331 = vmatpush.msra.mxu0 %v255
    %332 = vmatpush.msra.mxu0 %v253
    %333 = vmatpush.msra.mxu0 %v251
    %334 = vmatpush.msra.mxu0 %v249
    %335 = vmatpush.msra.mxu0 %v247
    %336 = vmatpush.msra.mxu0 %v245
    %337 = vmatpush.msra.mxu0 %v243
    %338 = vmatpush.msra.mxu0 %v241
    %339 = vmatpush.msra.mxu0 %v239
    %340 = vmatpush.msra.mxu0 %v237
    %341 = vmatpush.msra.mxu0 %v235
    %342 = vmatpush.msra.mxu0 %v233
    %343 = vmatpush.msra.mxu0 %v231
    %344 = vmatpush.msra.mxu0 %v229
    %345 = vmatmul.f32.gmra.mxu0 %v266
    %v346 = vpop.f32.mrf.mxu0
    %v347 = vadd.f32 %v327, %v346
    %348 = vdwg.mxu0
    %v353 = vsel %vm264, %v129, %v127
    %v354 = vsel %vm264, %v130, %v128
    %357 = vmatpush.msra.mxu0 %v161
    %358 = vmatpush.msra.mxu0 %v159
    %359 = vmatpush.msra.mxu0 %v157
    %360 = vmatpush.msra.mxu0 %v155
    %361 = vmatpush.msra.mxu0 %v153
    %362 = vmatpush.msra.mxu0 %v151
    %363 = vmatpush.msra.mxu0 %v149
    %364 = vmatpush.msra.mxu0 %v147
    %365 = vmatpush.msra.mxu0 %v145
    %366 = vmatpush.msra.mxu0 %v143
    %367 = vmatpush.msra.mxu0 %v141
    %368 = vmatpush.msra.mxu0 %v139
    %369 = vmatpush.msra.mxu0 %v137
    %370 = vmatpush.msra.mxu0 %v135
    %371 = vmatpush.msra.mxu0 %v133
    %372 = vmatpush.msra.mxu0 %v131
    %373 = vmatmul.f32.gmra.mxu0 %v353
    %v374 = vpop.f32.mrf.mxu0
    %v375 = vadd.f32 %v307, %v374
    %376 = vdwg.mxu0
    %377 = vmatpush.msra.mxu0 %v193
    %378 = vmatpush.msra.mxu0 %v191
    %379 = vmatpush.msra.mxu0 %v189
    %380 = vmatpush.msra.mxu0 %v187
    %381 = vmatpush.msra.mxu0 %v185
    %382 = vmatpush.msra.mxu0 %v183
    %383 = vmatpush.msra.mxu0 %v181
    %384 = vmatpush.msra.mxu0 %v179
    %385 = vmatpush.msra.mxu0 %v177
    %386 = vmatpush.msra.mxu0 %v175
    %387 = vmatpush.msra.mxu0 %v173
    %388 = vmatpush.msra.mxu0 %v171
    %389 = vmatpush.msra.mxu0 %v169
    %390 = vmatpush.msra.mxu0 %v167
    %391 = vmatpush.msra.mxu0 %v165
    %392 = vmatpush.msra.mxu0 %v163
    %393 = vmatmul.f32.gmra.mxu0 %v354
    %v394 = vpop.f32.mrf.mxu0
    %v395 = vadd.f32 %v375, %v394
    %396 = vdwg.mxu0
    %397 = vmatpush.msra.mxu0 %v162
    %398 = vmatpush.msra.mxu0 %v160
    %399 = vmatpush.msra.mxu0 %v158
    %400 = vmatpush.msra.mxu0 %v156
    %401 = vmatpush.msra.mxu0 %v154
    %402 = vmatpush.msra.mxu0 %v152
    %403 = vmatpush.msra.mxu0 %v150
    %404 = vmatpush.msra.mxu0 %v148
    %405 = vmatpush.msra.mxu0 %v146
    %406 = vmatpush.msra.mxu0 %v144
    %407 = vmatpush.msra.mxu0 %v142
    %408 = vmatpush.msra.mxu0 %v140
    %409 = vmatpush.msra.mxu0 %v138
    %410 = vmatpush.msra.mxu0 %v136
    %411 = vmatpush.msra.mxu0 %v134
    %412 = vmatpush.msra.mxu0 %v132
    %413 = vmatmul.f32.gmra.mxu0 %v353
    %v414 = vpop.f32.mrf.mxu0
    %v415 = vadd.f32 %v347, %v414
    %416 = vdwg.mxu0
    %417 = vmatpush.msra.mxu0 %v194
    %418 = vmatpush.msra.mxu0 %v192
    %419 = vmatpush.msra.mxu0 %v190
    %420 = vmatpush.msra.mxu0 %v188
    %421 = vmatpush.msra.mxu0 %v186
    %422 = vmatpush.msra.mxu0 %v184
    %423 = vmatpush.msra.mxu0 %v182
    %424 = vmatpush.msra.mxu0 %v180
    %425 = vmatpush.msra.mxu0 %v178
    %426 = vmatpush.msra.mxu0 %v176
    %427 = vmatpush.msra.mxu0 %v174
    %428 = vmatpush.msra.mxu0 %v172
    %429 = vmatpush.msra.mxu0 %v170
    %430 = vmatpush.msra.mxu0 %v168
    %431 = vmatpush.msra.mxu0 %v166
    %432 = vmatpush.msra.mxu0 %v164
    %433 = vmatmul.f32.gmra.mxu0 %v354
    %v434 = vpop.f32.mrf.mxu0
    %v435 = vadd.f32 %v415, %v434
    %436 = vdwg.mxu0
    %v437 = vxor.u32 %v395, 2147483648
    %v438 = vxor.u32 %v435, 2147483648
    %v439 = vmul.f32 %v437, 1.442695
    %v440 = vpow.pop %v439
    %v441 = vmul.f32 %v438, 1.442695
    %v442 = vpow.pop %v441
    %v443 = vadd.f32 %v440, 1.0
    %v444 = vadd.f32 %v442, 1.0
    %v445 = vrcp.pop %v443
    %v446 = vmul.f32 %v443, %v445
    %v447 = vsub.f32 1.0, %v446
    %v448 = vmul.f32 %v445, %v447
    %v449 = vadd.f32 %v445, %v448
    %vm450 = vweird.f32 %v443
    %vm451 = vweird.f32 %v445
    %vm452 = vmor %vm450, %vm451
    %v453 = vsel %vm452, %v445, %v449
    %v454 = vand.u32 2147483647, %v443
    %vm455 = vcmp.eq.f32.partialorder %v454, 8.507059e+37
    %v456 = vand.u32 %v443, 2147483648
    %v457 = vor.u32 1.1754944e-38, %v456
    %v458 = vsel %vm455, %v457, %v453
    %v459 = vmul.f32 1.0, %v458
    %v460 = vrcp.pop %v444
    %v461 = vmul.f32 %v444, %v460
    %v462 = vsub.f32 1.0, %v461
    %v463 = vmul.f32 %v460, %v462
    %v464 = vadd.f32 %v460, %v463
    %vm465 = vweird.f32 %v444
    %vm466 = vweird.f32 %v460
    %vm467 = vmor %vm465, %vm466
    %v468 = vsel %vm467, %v460, %v464
    %v469 = vand.u32 2147483647, %v444
    %vm470 = vcmp.eq.f32.partialorder %v469, 8.507059e+37
    %v471 = vand.u32 %v444, 2147483648
    %v472 = vor.u32 1.1754944e-38, %v471
    %v473 = vsel %vm470, %v472, %v468
    %v474 = vmul.f32 1.0, %v473
    %v477 = vrot.slane %v474, 6
    %vm478 = vcmask 1041408
    %v479 = vsel %vm478, %v459, %v477
    %481 = vst [vmem:[#allocation7] sm:$0xf] %v479
    // Predicated region
    $region18: #{tpu_custom_call.1} parent=1 // pred_check
      _
    $region19: #{tpu_custom_call.1} parent=1 // pred_check_branch
      %483 = sbr.rel (0) target = $region21
    $region20: #{tpu_custom_call.1} parent=1 // pred_region
      %485 = vsyncadd [#allocation4], 0
      %s487 = sshll.u32 [#allocation7], 4
      %s488 = int_to_ptr.vmem [resolvable:$true] %s487
      %s489 = sshll.u32 %s2, 4
      %s490 = int_to_ptr.hbm [resolvable:$true] %s489
      %492 = dma.vmem_to_hbm [thread:$0]  %s488, 64, %s490, [#allocation4]
    $region21: #{tpu_custom_call.1} parent=1 // pred_fallthru
      _
    // Predicated region
    $region22: #{tpu_custom_call.1} parent=1 // pred_check
      _
    $region23: #{tpu_custom_call.1} parent=1 // pred_check_branch
      %494 = sbr.rel (0) target = $region25
    $region24: #{tpu_custom_call.1} parent=1 // pred_region
      %496 = dma.done [#allocation4], 64
    $region25: #{tpu_custom_call.1} parent=1 // pred_fallthru
      _
    %497 = vsyncpa [#allocation3], 1
    %498 = vsyncpa [#allocation6], 1
    %499 = vsyncpa [#allocation4], 1

</llo_original>
